<compile_context>
chip_gen: v6e
topology: v6e:2x2x1
jax: 0.10.0
libtpu: 0.0.40
codegen_flags: <defaults>
</compile_context>

<pallas_src>
import functools

import jax
import jax.numpy as jnp
from jax import lax
from jax.experimental import pallas as pl
from jax.experimental.pallas import tpu as pltpu


def _style_loss_kernel(feat_ref, ref_ref, out_ref, acc_ref, *, inv_chw_sq):
    """Grid = (batch, k).  One step = one (ch, TK) slice of one batch element.

    feat_ref / ref_ref : (1, ch, TK) VMEM tiles
    out_ref            : (1, 8, 128) per-batch output block (written at last k)
    acc_ref            : (ch, ch) f32 scratch accumulating F@F^T - R@R^T
    """
    k = pl.program_id(1)
    nk = pl.num_programs(1)

    @pl.when(k == 0)
    def _():
        acc_ref[...] = jnp.zeros_like(acc_ref)

    f = feat_ref[0]  # (ch, TK)
    r = ref_ref[0]   # (ch, TK)

    # Contract the last (lane) dims directly on the MXU — no transpose.
    dn = (((1,), (1,)), ((), ()))
    acc_ref[...] += lax.dot_general(f, f, dn, preferred_element_type=jnp.float32)
    acc_ref[...] -= lax.dot_general(r, r, dn, preferred_element_type=jnp.float32)

    @pl.when(k == nk - 1)
    def _():
        d = acc_ref[...]
        # sum((G_f - G_r)^2) = sum(D^2) * (1/(ch*h*w))^2
        sse = jnp.sum(d * d) * inv_chw_sq
        out_ref[...] = jnp.full(out_ref.shape, sse, dtype=out_ref.dtype)


def _pick_tk(hw, ch, itemsize, max_tile_bytes=2 * 1024 * 1024):
    """Largest TK (multiple of 128, dividing hw) with ch*TK*itemsize <= budget."""
    if hw % 128 != 0:
        # Small / irregular spatial extent: take the whole row in one block
        # (a block dim equal to the full array dim is always legal).
        return hw
    m = hw // 128
    best = 128
    for t in range(1, m + 1):
        if m % t == 0:
            tk = 128 * t
            if ch * tk * itemsize <= max_tile_bytes:
                best = tk
    return best


def _gram_mse_per_batch(feat, ref, *, tk=None):
    """Per-batch sum((gram(feat)-gram(ref))^2).  feat/ref: (b, ch, hw) -> (b,)."""
    b, ch, hw = feat.shape
    itemsize = jnp.dtype(feat.dtype).itemsize
    if tk is None:
        tk = _pick_tk(hw, ch, itemsize)
    assert hw % tk == 0, (hw, tk)
    nk = hw // tk

    inv_chw = 1.0 / float(ch * hw)  # ch * h * w == ch * hw
    kernel = functools.partial(_style_loss_kernel, inv_chw_sq=inv_chw * inv_chw)

    out = pl.pallas_call(
        kernel,
        out_shape=jax.ShapeDtypeStruct((b, 8, 128), jnp.float32),
        grid_spec=pltpu.PrefetchScalarGridSpec(
            num_scalar_prefetch=0,
            grid=(b, nk),  # reduction (hw) axis last
            in_specs=[
                pl.BlockSpec((1, ch, tk), lambda i, k: (i, 0, k)),
                pl.BlockSpec((1, ch, tk), lambda i, k: (i, 0, k)),
            ],
            out_specs=pl.BlockSpec((1, 8, 128), lambda i, k: (i, 0, 0)),
            scratch_shapes=[pltpu.VMEM((ch, ch), jnp.float32)],
        ),
        compiler_params=pltpu.CompilerParams(
            dimension_semantics=("parallel", "arbitrary"),
            vmem_limit_bytes=40 * 1024 * 1024,
        ),
    )(feat, ref)
    return out[:, 0, 0]  # (b,)


def style_loss(features, g_refs):
    """JAX/Pallas equivalent of StyleLoss.forward.

    features, g_refs: lists of NCHW arrays (b, ch, h, w) of matching shapes.
    Returns scalar loss = sum_i MSE(gram(features[i]), gram(g_refs[i])).
    """
    loss = jnp.float32(0.0)
    for feat, g_re in zip(features, g_refs):
        b, ch, h, w = feat.shape
        f = feat.reshape(b, ch, h * w)   # no dtype upcast — kernel accumulates in f32
        r = g_re.reshape(b, ch, h * w)
        sse = _gram_mse_per_batch(f, r)  # (b,)
        # nn.MSELoss default reduction='mean' over the (b, ch, ch) gram tensor.
        loss = loss + jnp.sum(sse) / float(b * ch * ch)
    return loss


def _reference_style_loss(features, g_refs):
    """Pure-JAX reference (high-precision matmuls) for correctness checking."""
    def gram(y):
        b, ch, h, w = y.shape
        f = y.reshape(b, ch, h * w).astype(jnp.float32)
        g = jnp.einsum("bcn,bdn->bcd", f, f, precision="highest")
        return g / (ch * h * w)

    loss = 0.0
    for feat, g_re in zip(features, g_refs):
        g = gram(feat)
        g_r = gram(g_re)
        loss = loss + jnp.mean((g - g_r) ** 2)
    return loss


if __name__ == "__main__":
    key = jax.random.PRNGKey(0)
    k1, k2, k3, k4 = jax.random.split(key, 4)

    # Two "VGG-style" feature maps at different resolutions (NCHW).
    feat0 = jax.random.normal(k1, (2, 8, 16, 16), dtype=jnp.float32)
    ref0 = jax.random.normal(k2, (2, 8, 16, 16), dtype=jnp.float32)
    feat1 = jax.random.normal(k3, (2, 16, 8, 8), dtype=jnp.float32)
    ref1 = jax.random.normal(k4, (2, 16, 8, 8), dtype=jnp.float32)

    features = [feat0, feat1]
    g_refs = [ref0, ref1]

    out = jax.block_until_ready(style_loss(features, g_refs))
    expected = jax.block_until_ready(_reference_style_loss(features, g_refs))
    # Tolerance chosen to absorb MXU f32-pass rounding differences while still
    # catching any real scaling / accumulation bug (those are >> 1e-2 rel).
    assert jnp.allclose(out, expected, rtol=1e-2, atol=1e-7), (out, expected)

    # Also exercise the multi-step k (hw-tiled) accumulation path explicitly.
    f = feat0.reshape(2, 8, 256)
    r = ref0.reshape(2, 8, 256)
    sse_tiled = jax.block_until_ready(_gram_mse_per_batch(f, r, tk=128))  # nk = 2
    sse_full = jax.block_until_ready(_gram_mse_per_batch(f, r))           # nk = 1
    assert jnp.allclose(sse_tiled, sse_full, rtol=1e-3, atol=1e-7), (sse_tiled, sse_full)

    print("KERNEL_OK")
</pallas_src>

<mosaic_0001>
module attributes {stable_mosaic.version = 11 : i64} {
  func.func @_style_loss_kernel(%arg0: i32, %arg1: i32, %arg2: memref<1x8x256xf32, #tpu.memory_space<vmem>>, %arg3: memref<1x8x256xf32, #tpu.memory_space<vmem>>, %arg4: memref<1x8x128xf32, #tpu.memory_space<vmem>>, %arg5: memref<8x8xf32, #tpu.memory_space<vmem>>) attributes {dimension_semantics = [#tpu.dimension_semantics<parallel>, #tpu.dimension_semantics<arbitrary>], iteration_bounds = array<i64: 2, 1>, scalar_prefetch = 0 : i64, scratch_operands = 1 : i64, tpu.core_type = #tpu.core_type<tc>, window_params = [{transform_indices = @transform_0, window_bounds = array<i64: 1, 8, 256>}, {transform_indices = @transform_1, window_bounds = array<i64: 1, 8, 256>}, {transform_indices = @transform_2, window_bounds = array<i64: 1, 8, 128>}]} {
    %c0_i32 = arith.constant 0 : i32
    %0 = arith.cmpi eq, %arg1, %c0_i32 : i32
    %1 = arith.extui %0 : i1 to i32
    %c0_i32_0 = arith.constant 0 : i32
    %2 = arith.cmpi ne, %1, %c0_i32_0 : i32
    scf.if %2 {
      %cst_17 = arith.constant 0.000000e+00 : f32
      %18 = vector.broadcast %cst_17 : f32 to vector<8x8xf32>
      %c0_18 = arith.constant 0 : index
      %c0_19 = arith.constant 0 : index
      %19 = vector.load %arg5[%c0_18, %c0_19] : memref<8x8xf32, #tpu.memory_space<vmem>>, vector<8x8xf32>
      tpu.vector_store %arg5[%c0_18, %c0_19], %18 {strides = array<i32>} : memref<8x8xf32, #tpu.memory_space<vmem>>, vector<8x8xf32>,
    } else {
    }
    %c0 = arith.constant 0 : index
    %c0_1 = arith.constant 0 : index
    %c0_2 = arith.constant 0 : index
    %3 = vector.load %arg2[%c0, %c0_1, %c0_2] : memref<1x8x256xf32, #tpu.memory_space<vmem>>, vector<1x8x256xf32>
    %4 = vector.shape_cast %3 : vector<1x8x256xf32> to vector<8x256xf32>
    %c0_3 = arith.constant 0 : index
    %c0_4 = arith.constant 0 : index
    %c0_5 = arith.constant 0 : index
    %5 = vector.load %arg3[%c0_3, %c0_4, %c0_5] : memref<1x8x256xf32, #tpu.memory_space<vmem>>, vector<1x8x256xf32>
    %6 = vector.shape_cast %5 : vector<1x8x256xf32> to vector<8x256xf32>
    %c0_6 = arith.constant 0 : index
    %c0_7 = arith.constant 0 : index
    %7 = vector.load %arg5[%c0_6, %c0_7] : memref<8x8xf32, #tpu.memory_space<vmem>>, vector<8x8xf32>
    %cst = arith.constant dense<0.000000e+00> : vector<8x8xf32>
    %8 = tpu.matmul %4, %4, %cst {dimension_numbers = #tpu.dot_dimension_numbers<[1], [1], [0], [0], [0, 0, 1, 0], [], []>} : vector<8x256xf32>, vector<8x256xf32>, vector<8x8xf32> -> vector<8x8xf32>
    %9 = arith.addf %7, %8 : vector<8x8xf32>
    %c0_8 = arith.constant 0 : index
    %c0_9 = arith.constant 0 : index
    %10 = vector.load %arg5[%c0_8, %c0_9] : memref<8x8xf32, #tpu.memory_space<vmem>>, vector<8x8xf32>
    tpu.vector_store %arg5[%c0_8, %c0_9], %9 {strides = array<i32>} : memref<8x8xf32, #tpu.memory_space<vmem>>, vector<8x8xf32>,
    %c0_10 = arith.constant 0 : index
    %c0_11 = arith.constant 0 : index
    %11 = vector.load %arg5[%c0_10, %c0_11] : memref<8x8xf32, #tpu.memory_space<vmem>>, vector<8x8xf32>
    %cst_12 = arith.constant dense<0.000000e+00> : vector<8x8xf32>
    %12 = tpu.matmul %6, %6, %cst_12 {dimension_numbers = #tpu.dot_dimension_numbers<[1], [1], [0], [0], [0, 0, 1, 0], [], []>} : vector<8x256xf32>, vector<8x256xf32>, vector<8x8xf32> -> vector<8x8xf32>
    %13 = arith.subf %11, %12 : vector<8x8xf32>
    %c0_13 = arith.constant 0 : index
    %c0_14 = arith.constant 0 : index
    %14 = vector.load %arg5[%c0_13, %c0_14] : memref<8x8xf32, #tpu.memory_space<vmem>>, vector<8x8xf32>
    tpu.vector_store %arg5[%c0_13, %c0_14], %13 {strides = array<i32>} : memref<8x8xf32, #tpu.memory_space<vmem>>, vector<8x8xf32>,
    %c0_i32_15 = arith.constant 0 : i32
    %15 = arith.cmpi eq, %arg1, %c0_i32_15 : i32
    %16 = arith.extui %15 : i1 to i32
    %c0_i32_16 = arith.constant 0 : i32
    %17 = arith.cmpi ne, %16, %c0_i32_16 : i32
    scf.if %17 {
      %c0_17 = arith.constant 0 : index
      %c0_18 = arith.constant 0 : index
      %18 = vector.load %arg5[%c0_17, %c0_18] : memref<8x8xf32, #tpu.memory_space<vmem>>, vector<8x8xf32>
      %19 = arith.mulf %18, %18 : vector<8x8xf32>
      %20 = vector.shape_cast %19 : vector<8x8xf32> to vector<1x8x8xf32>
      %cst_19 = arith.constant dense<0.000000e+00> : vector<1xf32>
      %21 = vector.multi_reduction <add>, %20, %cst_19 [1, 2] : vector<1x8x8xf32> to vector<1xf32>
      %22 = vector.shape_cast %21 : vector<1xf32> to vector<1x1x1xf32>
      %23 = vector.extract %22[0, 0, 0] : f32 from vector<1x1x1xf32>
      %cst_20 = arith.constant 2.38418579E-7 : f32
      %24 = arith.mulf %23, %cst_20 : f32
      %25 = vector.broadcast %24 : f32 to vector<1x8x128xf32>
      %c0_21 = arith.constant 0 : index
      %c0_22 = arith.constant 0 : index
      %c0_23 = arith.constant 0 : index
      %26 = vector.load %arg4[%c0_21, %c0_22, %c0_23] : memref<1x8x128xf32, #tpu.memory_space<vmem>>, vector<1x8x128xf32>
      tpu.vector_store %arg4[%c0_21, %c0_22, %c0_23], %25 {strides = array<i32>} : memref<1x8x128xf32, #tpu.memory_space<vmem>>, vector<1x8x128xf32>,
    } else {
    }
    return
  }
  func.func @transform_0(%arg0: i32, %arg1: i32) -> (i32, i32, i32) {
    %c0_i32 = arith.constant 0 : i32
    %c0_i32_0 = arith.constant 0 : i32
    return %arg0, %c0_i32, %arg1 : i32, i32, i32
  }
  func.func @transform_1(%arg0: i32, %arg1: i32) -> (i32, i32, i32) {
    %c0_i32 = arith.constant 0 : i32
    %c0_i32_0 = arith.constant 0 : i32
    return %arg0, %c0_i32, %arg1 : i32, i32, i32
  }
  func.func @transform_2(%arg0: i32, %arg1: i32) -> (i32, i32, i32) {
    %c0_i32 = arith.constant 0 : i32
    %c0_i32_0 = arith.constant 0 : i32
    %c0_i32_1 = arith.constant 0 : i32
    return %arg0, %c0_i32, %c0_i32_0 : i32, i32, i32
  }
}

</mosaic_0001>

<llo_original>
// kernel: tpu_custom_call.1
$region0: #{tpu_custom_call.1}
  #allocation0 [shape = 'u32[]', space=smem, size = 0x4, offset = 0x4, fixed_abs, tag = 'smem constant byte address 0x4 - core index']
  #allocation1 [shape = 'u32[144,128]{1,0:T(1,128)}', space=vmem, size = 0x12000, scoped, tag = 'internal scratch']
  #allocation2 [shape = 'f32[8,8]{1,0:T(8,128)}', space=vmem, size = 0x1000, scoped, tag = 'scratch operand']
  %s0 = inlined_call_operand.hbm [shape: f32[2,8,256], index: 0, kind: input, shape index: {}]
  %s1 = inlined_call_operand.hbm [shape: f32[2,8,256], index: 1, kind: input, shape index: {}]
  %s2 = inlined_call_operand.hbm [shape: f32[2,8,128], index: 2, kind: output, shape index: {}]
  %s3 = sld [smem:[#allocation0]]
  $region57: #{tpu_custom_call.1} parent=0
    _
  %s5 = ssub.s32 1, %s3
  %s6 = scalar_select 0, %s5, %s3
  $region1: #{tpu_custom_call.1} parent=0
    #allocation3 [shape = 'u8[16384]{0}', space=vmem, size = 0x4000, scoped, tag = 'input window, operand 0']
    #allocation4 [shape = 's32[2]{0}', space=sflag, size = 0x8, scoped, tag = 'scoped memory for tpu_custom_call.1']
    #allocation5 [shape = 's32[2]{0}', space=sflag, size = 0x8, scoped, tag = 'scoped memory for tpu_custom_call.1']
    #allocation6 [shape = 'u8[16384]{0}', space=vmem, size = 0x4000, scoped, tag = 'input window, operand 1']
    #allocation7 [shape = 's32[2]{0}', space=sflag, size = 0x8, scoped, tag = 'scoped memory for tpu_custom_call.1']
    #allocation8 [shape = 'u8[8192]{0}', space=vmem, size = 0x2000, scoped, tag = 'output window, operand 0']
    %7 = vsyncpa [#allocation4], 0
    %s8 = scalar_lea.sflag [#allocation4], 1
    %9 = vsyncpa %s8, 0
    %10 = vsyncpa [#allocation7], 0
    %s11 = scalar_lea.sflag [#allocation7], 1
    %12 = vsyncpa %s11, 0
    %13 = vsyncpa [#allocation5], 0
    %s14 = scalar_lea.sflag [#allocation5], 1
    %15 = vsyncpa %s14, 0
    loop: start=0, step=1, limit=4
    $region2: #{tpu_custom_call.1} parent=1 // loop_pre_header
      _
    $region3: #{tpu_custom_call.1} parent=1 // loop_header
      %s17 = sphi 0, %s21
      %p18 = scmp.ge.s32.totalorder %s17, 4
      %s24 = sphi 0, %s36
      %s25 = sphi 0, %s32
      %s26 = sphi 0, %s24
      %s27 = sphi 0, %s25
      %s28 = sphi 0, %s26
      %s29 = sphi 0, %s27
      %s41 = sphi 0, %s43
      %s44 = sphi 0, %s41
      %s45 = sphi 0, %s44
      %s61 = sphi 0, %s45
      %s69 = sphi 0, %s71
      %s72 = sphi 0, %s69
      %s73 = sphi 0, %s72
      %s89 = sphi 0, %s73
      %s95 = sphi 0, %s97
      %s98 = sphi 0, %s95
      %s99 = sphi 0, %s98
      %s115 = sphi 0, %s99
    $region4: #{tpu_custom_call.1} parent=1 // loop_header_branch
      %20 = sbr.rel (%p18) target = $region8
    $region5: #{tpu_custom_call.1} parent=1 // loop_body
      %s22 = ssub.s32 %s17, 1
      %s23 = ssub.s32 %s17, 2
      %s30 = sadd.s32 1, %s25
      %p31 = scmp.ge.s32.totalorder %s30, 1
      %s32 = scalar_select %p31, 0, %s30
      %s33 = sadd.s32 1, %s24
      %s34 = scalar_select %p31, %s33, %s24
      %p35 = scmp.ge.s32.totalorder %s34, 2
      %s36 = scalar_select %p35, 0, %s34
      %s37 = ssub.s32 %s24, %s36
      %s38 = ssub.s32 %s25, %s32
      %s39 = sor.u32 %s37, %s38
      %p40 = scmp.eq.s32.totalorder %s39, 0
      %s42 = sadd.s32 %s41, 1
      %s43 = scalar_select %p40, %s41, %s42
      %p46 = pneg %p40
      %p47 = scmp.eq.s32.totalorder %s17, 1
      %p48 = por %p46, %p47
      %p49 = scmp.ne.s32.totalorder %s41, %s44
      %p50 = scmp.eq.s32.totalorder %s17, 0
      %p51 = por %p49, %p50
      %p52 = scmp.ne.s32.totalorder %s41, %s44
      %p53 = scmp.eq.s32.totalorder %s22, 1
      %p54 = por %p52, %p53
      %p55 = scmp.ne.s32.totalorder %s44, %s45
      %p56 = scmp.eq.s32.totalorder %s22, 0
      %p57 = por %p55, %p56
      %p58 = scmp.ne.s32.totalorder %s44, %s45
      %p59 = scmp.eq.s32.totalorder %s23, 1
      %p60 = por %p58, %p59
      %p62 = scmp.ne.s32.totalorder %s45, %s61
      %p63 = scmp.eq.s32.totalorder %s23, 0
      %p64 = por %p62, %p63
      %s65 = ssub.s32 %s24, %s36
      %s66 = ssub.s32 %s25, %s32
      %s67 = sor.u32 %s65, %s66
      %p68 = scmp.eq.s32.totalorder %s67, 0
      %s70 = sadd.s32 %s69, 1
      %s71 = scalar_select %p68, %s69, %s70
      %p74 = pneg %p68
      %p75 = scmp.eq.s32.totalorder %s17, 1
      %p76 = por %p74, %p75
      %p77 = scmp.ne.s32.totalorder %s69, %s72
      %p78 = scmp.eq.s32.totalorder %s17, 0
      %p79 = por %p77, %p78
      %p80 = scmp.ne.s32.totalorder %s69, %s72
      %p81 = scmp.eq.s32.totalorder %s22, 1
      %p82 = por %p80, %p81
      %p83 = scmp.ne.s32.totalorder %s72, %s73
      %p84 = scmp.eq.s32.totalorder %s22, 0
      %p85 = por %p83, %p84
      %p86 = scmp.ne.s32.totalorder %s72, %s73
      %p87 = scmp.eq.s32.totalorder %s23, 1
      %p88 = por %p86, %p87
      %p90 = scmp.ne.s32.totalorder %s73, %s89
      %p91 = scmp.eq.s32.totalorder %s23, 0
      %p92 = por %p90, %p91
      %s93 = ssub.s32 %s24, %s36
      %p94 = scmp.eq.s32.totalorder %s93, 0
      %s96 = sadd.s32 %s95, 1
      %s97 = scalar_select %p94, %s95, %s96
      %p100 = pneg %p94
      %p101 = scmp.eq.s32.totalorder %s17, 1
      %p102 = por %p100, %p101
      %p103 = scmp.ne.s32.totalorder %s95, %s98
      %p104 = scmp.eq.s32.totalorder %s17, 0
      %p105 = por %p103, %p104
      %p106 = scmp.ne.s32.totalorder %s95, %s98
      %p107 = scmp.eq.s32.totalorder %s22, 1
      %p108 = por %p106, %p107
      %p109 = scmp.ne.s32.totalorder %s98, %s99
      %p110 = scmp.eq.s32.totalorder %s22, 0
      %p111 = por %p109, %p110
      %p112 = scmp.ne.s32.totalorder %s98, %s99
      %p113 = scmp.eq.s32.totalorder %s23, 1
      %p114 = por %p112, %p113
      %p116 = scmp.ne.s32.totalorder %s99, %s115
      %p117 = scmp.eq.s32.totalorder %s23, 0
      %p118 = por %p116, %p117
      %p119 = scmp.le.s32.totalorder 1, %s17
      %p120 = scmp.lt.s32.totalorder %s17, 3
      %p121 = pnand %p119, %p120
      %p122 = pneg %p121
      // Predicated region
      $region9: #{tpu_custom_call.1} parent=5 // pred_check
        _
      $region10: #{tpu_custom_call.1} parent=5 // pred_check_branch
        %124 = sbr.rel (%p121) target = $region12
      $region11: #{tpu_custom_call.1} parent=5 // pred_region
        %s125 = ssub.s32 %s17, 1
      $region12: #{tpu_custom_call.1} parent=5 // pred_fallthru
        _
      %p126 = scmp.lt.s32.totalorder %s17, 2
      // Predicated region
      $region13: #{tpu_custom_call.1} parent=5 // pred_check
        %p127 = pneg %p126
      $region14: #{tpu_custom_call.1} parent=5 // pred_check_branch
        %129 = sbr.rel (%p127) target = $region16
      $region15: #{tpu_custom_call.1} parent=5 // pred_region
        // Predicated region
        $region17: #{tpu_custom_call.1} parent=15 // pred_check
          %p130 = pneg %p51
        $region18: #{tpu_custom_call.1} parent=15 // pred_check_branch
          %132 = sbr.rel (%p130) target = $region20
        $region19: #{tpu_custom_call.1} parent=15 // pred_region
          %s133 = sand.u32 %s41, 1
          %s134 = scalar_lea.sflag [#allocation4], %s133
          %s135 = sand.u32 %s41, 1
          %s136 = smul.addr %s135, 16
          %s137 = scalar_lea.vmem [#allocation3], %s136
          %s138 = smul.u32 2, %s25
          %s140 = ssub.s32 256, 256
          %141 = vsyncadd %s134, %s140
          %s142 = smul.addr %s24, 2
          %s143 = sadd.s32 %s138, %s142
          %s144 = smul.addr %s143, 128
          %s145 = scalar_lea.hbm %s0, %s144
          %s147 = sshll.u32 %s137, 4
          %s148 = int_to_ptr.vmem [resolvable:$true] %s147
          %150 = dma.hbm_to_vmem [thread:$0]  %s145, 256, %s148, %s134
        $region20: #{tpu_custom_call.1} parent=15 // pred_fallthru
          _
        // Predicated region
        $region21: #{tpu_custom_call.1} parent=15 // pred_check
          %p151 = pneg %p79
        $region22: #{tpu_custom_call.1} parent=15 // pred_check_branch
          %153 = sbr.rel (%p151) target = $region24
        $region23: #{tpu_custom_call.1} parent=15 // pred_region
          %s154 = sand.u32 %s69, 1
          %s155 = scalar_lea.sflag [#allocation7], %s154
          %s156 = sand.u32 %s69, 1
          %s157 = smul.addr %s156, 16
          %s158 = scalar_lea.vmem [#allocation6], %s157
          %s159 = smul.u32 2, %s25
          %s161 = ssub.s32 256, 256
          %162 = vsyncadd %s155, %s161
          %s163 = smul.addr %s24, 2
          %s164 = sadd.s32 %s159, %s163
          %s165 = smul.addr %s164, 128
          %s166 = scalar_lea.hbm %s1, %s165
          %s168 = sshll.u32 %s158, 4
          %s169 = int_to_ptr.vmem [resolvable:$true] %s168
          %171 = dma.hbm_to_vmem [thread:$0]  %s166, 256, %s169, %s155
        $region24: #{tpu_custom_call.1} parent=15 // pred_fallthru
          _
      $region16: #{tpu_custom_call.1} parent=5 // pred_fallthru
        _
      %p172 = scmp.le.s32.totalorder 1, %s17
      %p173 = scmp.lt.s32.totalorder %s17, 3
      %p174 = pnand %p172, %p173
      %p175 = pneg %p174
      // Predicated region
      $region25: #{tpu_custom_call.1} parent=5 // pred_check
        _
      $region26: #{tpu_custom_call.1} parent=5 // pred_check_branch
        %177 = sbr.rel (%p174) target = $region28
      $region27: #{tpu_custom_call.1} parent=5 // pred_region
        %s178 = ssub.s32 %s17, 1
        %s179 = sand.u32 %s44, 1
        %s180 = scalar_lea.sflag [#allocation4], %s179
        %s181 = sand.u32 %s44, 1
        %s182 = smul.addr %s181, 16
        %s183 = scalar_lea.vmem [#allocation3], %s182
        // Predicated region
        $region29: #{tpu_custom_call.1} parent=27 // pred_check
          %p184 = pneg %p57
        $region30: #{tpu_custom_call.1} parent=27 // pred_check_branch
          %186 = sbr.rel (%p184) target = $region32
        $region31: #{tpu_custom_call.1} parent=27 // pred_region
          %187 = dma.done %s180, 256
        $region32: #{tpu_custom_call.1} parent=27 // pred_fallthru
          _
        %s188 = sand.u32 %s72, 1
        %s189 = scalar_lea.sflag [#allocation7], %s188
        %s190 = sand.u32 %s72, 1
        %s191 = smul.addr %s190, 16
        %s192 = scalar_lea.vmem [#allocation6], %s191
        // Predicated region
        $region33: #{tpu_custom_call.1} parent=27 // pred_check
          %p193 = pneg %p85
        $region34: #{tpu_custom_call.1} parent=27 // pred_check_branch
          %195 = sbr.rel (%p193) target = $region36
        $region35: #{tpu_custom_call.1} parent=27 // pred_region
          %196 = dma.done %s189, 256
        $region36: #{tpu_custom_call.1} parent=27 // pred_fallthru
          _
        %s197 = sand.u32 %s44, 1
        %s198 = scalar_lea.sflag [#allocation4], %s197
        %s199 = sand.u32 %s44, 1
        %s200 = smul.addr %s199, 16
        %s201 = scalar_lea.vmem [#allocation3], %s200
        %p202 = pneg %p57
        %p203 = pneg %p54
        %s204 = sand.u32 %s72, 1
        %s205 = scalar_lea.sflag [#allocation7], %s204
        %s206 = sand.u32 %s72, 1
        %s207 = smul.addr %s206, 16
        %s208 = scalar_lea.vmem [#allocation6], %s207
        %p209 = pneg %p85
        %p210 = pneg %p82
        %p211 = pneg %p111
        %p212 = pneg %p108
        %s213 = sand.u32 %s98, 1
        %s214 = scalar_lea.sflag [#allocation5], %s213
        %s215 = sand.u32 %s98, 1
        %s216 = smul.addr %s215, 8
        %s217 = scalar_lea.vmem [#allocation8], %s216
        %s218 = smul.u32 2, %s27
        %s219 = smul.u32 2, %s27
        %p220 = scmp.eq.s32.totalorder %s27, 0
        // Predicated region
        $region37: #{tpu_custom_call.1} parent=27 // pred_check
          %p221 = pneg %p220
        $region38: #{tpu_custom_call.1} parent=27 // pred_check_branch
          %223 = sbr.rel (%p221) target = $region40
        $region39: #{tpu_custom_call.1} parent=27 // pred_region
          %vm224 = vcmask 64512
          %225 = vst.msk [vmem:[#allocation2] sm:$0xff] %vm224, 0.0
        $region40: #{tpu_custom_call.1} parent=27 // pred_fallthru
          _
        %v226 = vld [vmem:[%s183] sm:$0xff]
        %v227 = vld [vmem:[%s183 + $0x8] sm:$0xff]
        %v228 = vld [vmem:[%s192] sm:$0xff]
        %v229 = vld [vmem:[%s192 + $0x8] sm:$0xff]
        %v230 = vld [vmem:[#allocation2] sm:$0xff]
        %231 = vmatprep.subr.mxu0 0.0
        %232 = vmatpush1.xpose.msra.mxu0 0.0
        %233 = vmatprep.subr.mxu0 0.0
        %234 = vmatpush1.xpose.msra.mxu0 0.0
        %235 = vmatprep.subr.mxu0 0.0
        %236 = vmatpush1.xpose.msra.mxu0 0.0
        %237 = vmatprep.subr.mxu0 0.0
        %238 = vmatpush1.xpose.msra.mxu0 0.0
        %239 = vmatprep.subr.mxu0 0.0
        %240 = vmatpush1.xpose.msra.mxu0 0.0
        %241 = vmatprep.subr.mxu0 0.0
        %242 = vmatpush1.xpose.msra.mxu0 0.0
        %243 = vmatprep.subr.mxu0 0.0
        %244 = vmatpush1.xpose.msra.mxu0 0.0
        %245 = vmatprep.subr.mxu0 0.0
        %246 = vmatpush1.xpose.msra.mxu0 0.0
        %247 = vmatprep.subr.mxu0 0.0
        %248 = vmatpush1.xpose.msra.mxu0 0.0
        %249 = vmatprep.subr.mxu0 0.0
        %250 = vmatpush1.xpose.msra.mxu0 0.0
        %251 = vmatprep.subr.mxu0 0.0
        %252 = vmatpush1.xpose.msra.mxu0 0.0
        %253 = vmatprep.subr.mxu0 0.0
        %254 = vmatpush1.xpose.msra.mxu0 0.0
        %255 = vmatprep.subr.mxu0 0.0
        %256 = vmatpush1.xpose.msra.mxu0 0.0
        %257 = vmatprep.subr.mxu0 0.0
        %258 = vmatpush1.xpose.msra.mxu0 0.0
        %259 = vmatprep.subr.mxu0 0.0
        %260 = vmatpush1.xpose.msra.mxu0 0.0
        %261 = vmatprep.subr.mxu0 %v227
        %262 = vmatpush1.xpose.msra.mxu0 %v226
        %263 = vmatprep.subr.mxu0 0.0
        %264 = vmatpush2.xpose.msra.mxu0 0.0
        %265 = vmatprep.subr.mxu0 0.0
        %266 = vmatpush2.xpose.msra.mxu0 0.0
        %267 = vmatprep.subr.mxu0 0.0
        %268 = vmatpush2.xpose.msra.mxu0 0.0
        %269 = vmatprep.subr.mxu0 0.0
        %270 = vmatpush2.xpose.msra.mxu0 0.0
        %271 = vmatprep.subr.mxu0 0.0
        %272 = vmatpush2.xpose.msra.mxu0 0.0
        %273 = vmatprep.subr.mxu0 0.0
        %274 = vmatpush2.xpose.msra.mxu0 0.0
        %275 = vmatprep.subr.mxu0 0.0
        %276 = vmatpush2.xpose.msra.mxu0 0.0
        %277 = vmatprep.subr.mxu0 0.0
        %278 = vmatpush2.xpose.msra.mxu0 0.0
        %279 = vmatprep.subr.mxu0 0.0
        %280 = vmatpush2.xpose.msra.mxu0 0.0
        %281 = vmatprep.subr.mxu0 0.0
        %282 = vmatpush2.xpose.msra.mxu0 0.0
        %283 = vmatprep.subr.mxu0 0.0
        %284 = vmatpush2.xpose.msra.mxu0 0.0
        %285 = vmatprep.subr.mxu0 0.0
        %286 = vmatpush2.xpose.msra.mxu0 0.0
        %287 = vmatprep.subr.mxu0 0.0
        %288 = vmatpush2.xpose.msra.mxu0 0.0
        %289 = vmatprep.subr.mxu0 0.0
        %290 = vmatpush2.xpose.msra.mxu0 0.0
        %291 = vmatprep.subr.mxu0 0.0
        %292 = vmatpush2.xpose.msra.mxu0 0.0
        %293 = vmatprep.subr.mxu0 0.0
        %294 = vmatpush2.xpose.msra.mxu0 0.0
        %295 = vmatprep.mubr.f32.mxu0 %v227
        %296 = vmatmul.mubr.f32.gmra.mxu0 %v226
        %v297 = vpop.f32.mrf.mxu0
        %v298 = vadd.f32 0.0, %v297
        %v299 = vpop.f32.mrf.mxu0
        %300 = vdwg.mxu0
        %v301 = vadd.f32 %v230, %v298
        %vm302 = vcmask 64512
        %303 = vst.msk [vmem:[#allocation2] sm:$0xff] %vm302, %v301
        %v304 = vld [vmem:[#allocation2] sm:$0xff]
        %305 = vmatprep.subr.mxu0 0.0
        %306 = vmatpush1.xpose.msra.mxu0 0.0
        %307 = vmatprep.subr.mxu0 0.0
        %308 = vmatpush1.xpose.msra.mxu0 0.0
        %309 = vmatprep.subr.mxu0 0.0
        %310 = vmatpush1.xpose.msra.mxu0 0.0
        %311 = vmatprep.subr.mxu0 0.0
        %312 = vmatpush1.xpose.msra.mxu0 0.0
        %313 = vmatprep.subr.mxu0 0.0
        %314 = vmatpush1.xpose.msra.mxu0 0.0
        %315 = vmatprep.subr.mxu0 0.0
        %316 = vmatpush1.xpose.msra.mxu0 0.0
        %317 = vmatprep.subr.mxu0 0.0
        %318 = vmatpush1.xpose.msra.mxu0 0.0
        %319 = vmatprep.subr.mxu0 0.0
        %320 = vmatpush1.xpose.msra.mxu0 0.0
        %321 = vmatprep.subr.mxu0 0.0
        %322 = vmatpush1.xpose.msra.mxu0 0.0
        %323 = vmatprep.subr.mxu0 0.0
        %324 = vmatpush1.xpose.msra.mxu0 0.0
        %325 = vmatprep.subr.mxu0 0.0
        %326 = vmatpush1.xpose.msra.mxu0 0.0
        %327 = vmatprep.subr.mxu0 0.0
        %328 = vmatpush1.xpose.msra.mxu0 0.0
        %329 = vmatprep.subr.mxu0 0.0
        %330 = vmatpush1.xpose.msra.mxu0 0.0
        %331 = vmatprep.subr.mxu0 0.0
        %332 = vmatpush1.xpose.msra.mxu0 0.0
        %333 = vmatprep.subr.mxu0 0.0
        %334 = vmatpush1.xpose.msra.mxu0 0.0
        %335 = vmatprep.subr.mxu0 %v229
        %336 = vmatpush1.xpose.msra.mxu0 %v228
        %337 = vmatprep.subr.mxu0 0.0
        %338 = vmatpush2.xpose.msra.mxu0 0.0
        %339 = vmatprep.subr.mxu0 0.0
        %340 = vmatpush2.xpose.msra.mxu0 0.0
        %341 = vmatprep.subr.mxu0 0.0
        %342 = vmatpush2.xpose.msra.mxu0 0.0
        %343 = vmatprep.subr.mxu0 0.0
        %344 = vmatpush2.xpose.msra.mxu0 0.0
        %345 = vmatprep.subr.mxu0 0.0
        %346 = vmatpush2.xpose.msra.mxu0 0.0
        %347 = vmatprep.subr.mxu0 0.0
        %348 = vmatpush2.xpose.msra.mxu0 0.0
        %349 = vmatprep.subr.mxu0 0.0
        %350 = vmatpush2.xpose.msra.mxu0 0.0
        %351 = vmatprep.subr.mxu0 0.0
        %352 = vmatpush2.xpose.msra.mxu0 0.0
        %353 = vmatprep.subr.mxu0 0.0
        %354 = vmatpush2.xpose.msra.mxu0 0.0
        %355 = vmatprep.subr.mxu0 0.0
        %356 = vmatpush2.xpose.msra.mxu0 0.0
        %357 = vmatprep.subr.mxu0 0.0
        %358 = vmatpush2.xpose.msra.mxu0 0.0
        %359 = vmatprep.subr.mxu0 0.0
        %360 = vmatpush2.xpose.msra.mxu0 0.0
        %361 = vmatprep.subr.mxu0 0.0
        %362 = vmatpush2.xpose.msra.mxu0 0.0
        %363 = vmatprep.subr.mxu0 0.0
        %364 = vmatpush2.xpose.msra.mxu0 0.0
        %365 = vmatprep.subr.mxu0 0.0
        %366 = vmatpush2.xpose.msra.mxu0 0.0
        %367 = vmatprep.subr.mxu0 0.0
        %368 = vmatpush2.xpose.msra.mxu0 0.0
        %369 = vmatprep.mubr.f32.mxu0 %v229
        %370 = vmatmul.mubr.f32.gmra.mxu0 %v228
        %v371 = vpop.f32.mrf.mxu0
        %v372 = vadd.f32 0.0, %v371
        %v373 = vpop.f32.mrf.mxu0
        %374 = vdwg.mxu0
        %v375 = vsub.f32 %v304, %v372
        %376 = vst.msk [vmem:[#allocation2] sm:$0xff] %vm302, %v375
        // Predicated region
        $region41: #{tpu_custom_call.1} parent=27 // pred_check
          %p377 = pneg %p220
        $region42: #{tpu_custom_call.1} parent=27 // pred_check_branch
          %379 = sbr.rel (%p377) target = $region44
        $region43: #{tpu_custom_call.1} parent=27 // pred_region
          %v380 = vld [vmem:[#allocation2] sm:$0xff]
          %v381 = vmul.f32 %v380, %v380
          %v382 = vsel %vm302, %v381, 0.0
          %383 = vadd.xlane.f32.xlu0 %v382
          %v384 = vpop.xlane.xlu0 %383
          %v385 = vrot.slane %v384, 4
          %v386 = vadd.f32 %v384, %v385
          %v387 = vrot.slane %v386, 2
          %v388 = vadd.f32 %v386, %v387
          %v389 = vrot.slane %v388, 1
          %v390 = vadd.f32 %v388, %v389
          %s391 = vtos %v390
          %s392 = smul.f32 %s391, 2.3841858e-07
          %v393 = vstv %s392
          %394 = vst [vmem:[%s217] sm:$0xff] %v393
        $region44: #{tpu_custom_call.1} parent=27 // pred_fallthru
          _
        %s395 = sand.u32 %s98, 1
        %s396 = scalar_lea.sflag [#allocation5], %s395
        %s397 = sand.u32 %s98, 1
        %s398 = smul.addr %s397, 8
        %s399 = scalar_lea.vmem [#allocation8], %s398
        // Predicated region
        $region45: #{tpu_custom_call.1} parent=27 // pred_check
          %p400 = pneg %p108
        $region46: #{tpu_custom_call.1} parent=27 // pred_check_branch
          %402 = sbr.rel (%p400) target = $region48
        $region47: #{tpu_custom_call.1} parent=27 // pred_region
          %s404 = ssub.s32 128, 128
          %405 = vsyncadd %s396, %s404
          %s406 = smul.addr %s26, 128
          %s407 = scalar_lea.hbm %s2, %s406
          %s409 = sshll.u32 %s399, 4
          %s410 = int_to_ptr.vmem [resolvable:$true] %s409
          %412 = dma.vmem_to_hbm [thread:$0]  %s410, 128, %s407, %s396
        $region48: #{tpu_custom_call.1} parent=27 // pred_fallthru
          _
      $region28: #{tpu_custom_call.1} parent=5 // pred_fallthru
        _
      %p413 = scmp.le.s32.totalorder 2, %s17
      // Predicated region
      $region49: #{tpu_custom_call.1} parent=5 // pred_check
        %p414 = pneg %p413
      $region50: #{tpu_custom_call.1} parent=5 // pred_check_branch
        %416 = sbr.rel (%p414) target = $region52
      $region51: #{tpu_custom_call.1} parent=5 // pred_region
        %s417 = ssub.s32 %s17, 2
        // Predicated region
        $region53: #{tpu_custom_call.1} parent=51 // pred_check
          %p418 = pneg %p114
        $region54: #{tpu_custom_call.1} parent=51 // pred_check_branch
          %420 = sbr.rel (%p418) target = $region56
        $region55: #{tpu_custom_call.1} parent=51 // pred_region
          %s421 = sand.u32 %s99, 1
          %s422 = scalar_lea.sflag [#allocation5], %s421
          %s423 = sand.u32 %s99, 1
          %s424 = smul.addr %s423, 8
          %s425 = scalar_lea.vmem [#allocation8], %s424
          %426 = dma.done %s422, 128
        $region56: #{tpu_custom_call.1} parent=51 // pred_fallthru
          _
      $region52: #{tpu_custom_call.1} parent=5 // pred_fallthru
        _
    $region6: #{tpu_custom_call.1} parent=1 // loop_footer
      %s21 = sadd.s32 1, %s17
    $region7: #{tpu_custom_call.1} parent=1 // loop_footer_branch
      %16 = sbr.rel target = $region3
    $region8: #{tpu_custom_call.1} parent=1 // loop_exit
      _
    %427 = vsyncpa [#allocation4], 1
    %s428 = scalar_lea.sflag [#allocation4], 1
    %429 = vsyncpa %s428, 1
    %430 = vsyncpa [#allocation7], 1
    %s431 = scalar_lea.sflag [#allocation7], 1
    %432 = vsyncpa %s431, 1
    %433 = vsyncpa [#allocation5], 1
    %s434 = scalar_lea.sflag [#allocation5], 1
    %435 = vsyncpa %s434, 1

</llo_original>
